<compile_context>
chip_gen: v6e
topology: v6e:2x2x1
jax: 0.10.0
libtpu: 0.0.40
codegen_flags: <defaults>
</compile_context>

<pallas_src>
import functools

import jax
import jax.numpy as jnp
from jax import lax
from jax.experimental import pallas as pl
from jax.experimental.pallas import tpu as pltpu


_FALLBACK_BYTES = 64 * 1024   # below this, let XLA's fused reduce do it
_MIB = 1024 * 1024


def _tpu_vmem_capacity_bytes():
    """Physical VMEM per core, or None if it cannot be determined."""
    try:
        info = pltpu.get_tpu_info()
        cap = getattr(info, "vmem_capacity_bytes", None)
        if cap is not None and int(cap) > 0:
            return int(cap)
    except Exception:
        pass
    return None


def _generation_params():
    """Returns (target_tile_bytes, vmem_limit_cap_bytes, two_core_small_vmem)."""
    cap = _tpu_vmem_capacity_bytes()
    if cap is not None and cap >= 96 * _MIB:
        # v5e / v6e: 128 MiB physical VMEM -> big tiles cut per-step overhead.
        return 12 * _MIB, 96 * _MIB, False
    if cap is not None:
        # v7x-class: 64 MiB physical VMEM per TensorCore, 2 cores per chip.
        # Keep tiles modest and leave headroom for Mosaic internal scratch.
        return 5 * _MIB, 48 * _MIB, True
    # Unknown hardware: conservative defaults that are safe everywhere.
    return 6 * _MIB, 48 * _MIB, False


def _gap1d_kernel(x_ref, o_ref, acc_ref, *, inv_l, seq_len, block_l, mask_tail):
    """x_ref: (TB, TL, TC) tile; o_ref: (TB, TC); acc_ref: f32 (TB, TC) scratch."""
    l = pl.program_id(2)
    last = pl.num_programs(2) - 1

    @pl.when(l == 0)
    def _():
        acc_ref[...] = jnp.zeros_like(acc_ref)

    if mask_tail:
        # Only the final L-step can contain out-of-range rows; keep the
        # iota + compare + select entirely off the hot accumulate path.
        @pl.when(l != last)
        def _():
            acc_ref[...] += jnp.sum(x_ref[...], axis=1, dtype=jnp.float32)

        @pl.when(l == last)
        def _():
            x = x_ref[...]
            # (1, TL, 1) position column broadcast over (TB, TL, TC) instead
            # of a full-tile int32 iota.  Select form is NaN-safe for OOB pad.
            pos = last * block_l + lax.broadcasted_iota(
                jnp.int32, (1, block_l, 1), 1)
            x = jnp.where(pos < seq_len, x, jnp.zeros_like(x))
            acc_ref[...] += jnp.sum(x, axis=1, dtype=jnp.float32)
    else:
        acc_ref[...] += jnp.sum(x_ref[...], axis=1, dtype=jnp.float32)

    @pl.when(l == last)
    def _():
        o_ref[...] = (acc_ref[...] * inv_l).astype(o_ref.dtype)


def _choose_tiles(B, L, C, itemsize, block_l, target_tile_bytes, two_core):
    # Sublane-packing multiple: 8 for 32-bit, 16 for bf16, 32 for int8/fp8.
    pack = 8 * max(1, 4 // max(1, itemsize))

    # Channel tile: lane-dense (multiple of 128) when possible, else full C
    # (a full-extent block is always legal even if C % 128 != 0).
    if C % 128 == 0:
        TC = min(C, 2048)
    else:
        TC = C

    # Batch tile: the output block's second-to-last dim must be a multiple of
    # 8 or equal B.  Ragged edge blocks are fine (OOB writes are dropped).
    TB = B if B <= 8 else 8

    # 2-TensorCore chips: avoid a degenerate (1, 1, Lt) grid so both cores get
    # work; split C into two exact 128-multiple halves when possible.
    if (two_core and pl.cdiv(B, TB) * pl.cdiv(C, TC) == 1
            and C >= 256 and C % 256 == 0):
        TC = C // 2

    # Sequence (reduction) tile: spend the byte budget on TL (longer
    # contiguous DMA runs) rather than TB.
    if block_l is None:
        row_bytes = max(1, TB * TC * itemsize)
        TL = target_tile_bytes // row_bytes
    else:
        TL = block_l

    if TL >= L:
        TL = L                                  # full-extent block: always legal
        # L fully covered with budget left over: grow TB in multiples of 8
        # (but never re-degenerate the parallel grid on 2-core chips).
        if block_l is None and B > 8 and (not two_core or pl.cdiv(C, TC) >= 2):
            tb_fit = (target_tile_bytes // max(1, L * TC * itemsize)) // 8 * 8
            if tb_fit >= B:
                TB = B
            elif tb_fit > TB:
                TB = tb_fit
    else:
        TL = max(pack, (TL // pack) * pack)     # dtype sublane-packing multiple
    return TB, TL, TC


def global_avg_pool1d(x, *, block_l=None, force_pallas=False):
    """Pallas equivalent of GlobalAvgPool1d.forward: mean over dim 1 of (B, L, C)."""
    B, L, C = x.shape
    itemsize = jnp.dtype(x.dtype).itemsize

    # Tiny inputs: pallas_call + per-step overhead dwarfs a few-KiB reduction.
    if not force_pallas and B * L * C * itemsize <= _FALLBACK_BYTES:
        return jnp.mean(x, axis=1, dtype=jnp.float32).astype(x.dtype)

    target_tile_bytes, vmem_cap, two_core = _generation_params()
    TB, TL, TC = _choose_tiles(B, L, C, itemsize, block_l,
                               target_tile_bytes, two_core)
    grid = (pl.cdiv(B, TB), pl.cdiv(C, TC), pl.cdiv(L, TL))
    mask_tail = (L % TL) != 0

    kernel = functools.partial(
        _gap1d_kernel,
        inv_l=float(1.0 / L),
        seq_len=L,
        block_l=TL,
        mask_tail=mask_tail,
    )

    # Pipeline depth: a third input buffer on v7x-class chips (tiles drain in
    # ~1.5-2 us at 3.2 TB/s, so DMA-issue latency is proportionally exposed).
    n_buf = 3 if (two_core and grid[2] > 2 and hasattr(pl, "Buffered")) else 2
    if n_buf == 3:
        in_spec = pl.BlockSpec((TB, TL, TC), lambda b, c, l: (b, l, c),
                               pipeline_mode=pl.Buffered(3))
    else:
        in_spec = pl.BlockSpec((TB, TL, TC), lambda b, c, l: (b, l, c))

    # VMEM budget: n_buf input tiles + double-buffered output + f32 scratch,
    # with 2x headroom, clamped per generation (96 MiB on 128-MiB chips,
    # 48 MiB on 64-MiB chips to leave Mosaic internal-scratch headroom).
    in_tile = TB * TL * TC * itemsize
    out_tile = TB * TC * itemsize
    acc_tile = TB * TC * 4
    vmem_limit = int(min(vmem_cap,
                         max(2 * (n_buf * in_tile + 2 * out_tile + acc_tile),
                             16 * _MIB)))

    return pl.pallas_call(
        kernel,
        out_shape=jax.ShapeDtypeStruct((B, C), x.dtype),
        grid_spec=pltpu.PrefetchScalarGridSpec(
            num_scalar_prefetch=0,
            grid=grid,
            in_specs=[in_spec],
            out_specs=pl.BlockSpec((TB, TC), lambda b, c, l: (b, c)),
            scratch_shapes=[pltpu.VMEM((TB, TC), jnp.float32)],
        ),
        compiler_params=pltpu.CompilerParams(
            dimension_semantics=("parallel", "parallel", "arbitrary"),
            vmem_limit_bytes=vmem_limit,
        ),
    )(x)


if __name__ == "__main__":
    key = jax.random.PRNGKey(0)
    k1, k2, k3 = jax.random.split(key, 3)

    # Case A: tiny module-demo shape (batch=2, seq=16, hidden=32).
    #   default wrapper takes the shape-gated XLA fallback; force_pallas
    #   additionally exercises the kernel with full-extent blocks.
    xa = jax.random.normal(k1, (2, 16, 32), dtype=jnp.float32)
    ref_a = jnp.mean(xa, axis=1)
    out_a0 = jax.block_until_ready(global_avg_pool1d(xa))
    out_a1 = jax.block_until_ready(global_avg_pool1d(xa, force_pallas=True))
    assert out_a0.shape == out_a1.shape == (2, 32)
    assert jnp.allclose(out_a0, ref_a, atol=1e-5, rtol=1e-5)
    assert jnp.allclose(out_a1, ref_a, atol=1e-5, rtol=1e-5)

    # Case B: ragged sequence (L % block_l != 0) with lane-dense C=128 ->
    # exercises the L-tiled accumulator path and the last-step-only tail mask.
    xb = jax.random.normal(k2, (4, 100, 128), dtype=jnp.float32)
    ref_b = jnp.mean(xb, axis=1)
    out_b = jax.block_until_ready(
        global_avg_pool1d(xb, block_l=32, force_pallas=True))
    assert out_b.shape == (4, 128)
    assert jnp.allclose(out_b, ref_b, atol=1e-5, rtol=1e-5)

    # Case C: B not a multiple of the batch tile (edge output blocks dropped),
    # bf16 input with f32 accumulation and 16-row sublane packing.
    xc = jax.random.normal(k3, (10, 64, 256), dtype=jnp.bfloat16)
    ref_c = jnp.mean(xc.astype(jnp.float32), axis=1)
    out_c = jax.block_until_ready(global_avg_pool1d(xc, force_pallas=True))
    assert out_c.shape == (10, 256)
    assert jnp.allclose(out_c.astype(jnp.float32), ref_c, atol=1e-2, rtol=1e-2)

    print("KERNEL_OK")
</pallas_src>

<mosaic_0001>
module attributes {stable_mosaic.version = 11 : i64} {
  func.func @_gap1d_kernel(%arg0: i32, %arg1: i32, %arg2: i32, %arg3: memref<2x16x32xf32, #tpu.memory_space<vmem>>, %arg4: memref<2x32xf32, #tpu.memory_space<vmem>>, %arg5: memref<2x32xf32, #tpu.memory_space<vmem>>) attributes {dimension_semantics = [#tpu.dimension_semantics<parallel>, #tpu.dimension_semantics<parallel>, #tpu.dimension_semantics<arbitrary>], iteration_bounds = array<i64: 1, 1, 1>, scalar_prefetch = 0 : i64, scratch_operands = 1 : i64, tpu.core_type = #tpu.core_type<tc>, window_params = [{transform_indices = @transform_0, window_bounds = array<i64: 2, 16, 32>}, {transform_indices = @transform_1, window_bounds = array<i64: 2, 32>}]} {
    %c0_i32 = arith.constant 0 : i32
    %0 = arith.cmpi eq, %arg2, %c0_i32 : i32
    %1 = arith.extui %0 : i1 to i32
    %c0_i32_0 = arith.constant 0 : i32
    %2 = arith.cmpi ne, %1, %c0_i32_0 : i32
    scf.if %2 {
      %cst_9 = arith.constant 0.000000e+00 : f32
      %11 = vector.broadcast %cst_9 : f32 to vector<2x32xf32>
      %c0_10 = arith.constant 0 : index
      %c0_11 = arith.constant 0 : index
      %12 = vector.load %arg5[%c0_10, %c0_11] : memref<2x32xf32, #tpu.memory_space<vmem>>, vector<2x32xf32>
      tpu.vector_store %arg5[%c0_10, %c0_11], %11 {strides = array<i32>} : memref<2x32xf32, #tpu.memory_space<vmem>>, vector<2x32xf32>,
    } else {
    }
    %c0 = arith.constant 0 : index
    %c0_1 = arith.constant 0 : index
    %3 = vector.load %arg5[%c0, %c0_1] : memref<2x32xf32, #tpu.memory_space<vmem>>, vector<2x32xf32>
    %c0_2 = arith.constant 0 : index
    %c0_3 = arith.constant 0 : index
    %c0_4 = arith.constant 0 : index
    %4 = vector.load %arg3[%c0_2, %c0_3, %c0_4] : memref<2x16x32xf32, #tpu.memory_space<vmem>>, vector<2x16x32xf32>
    %cst = arith.constant dense<0.000000e+00> : vector<2x32xf32>
    %5 = vector.multi_reduction <add>, %4, %cst [1] : vector<2x16x32xf32> to vector<2x32xf32>
    %6 = arith.addf %3, %5 : vector<2x32xf32>
    %c0_5 = arith.constant 0 : index
    %c0_6 = arith.constant 0 : index
    %7 = vector.load %arg5[%c0_5, %c0_6] : memref<2x32xf32, #tpu.memory_space<vmem>>, vector<2x32xf32>
    tpu.vector_store %arg5[%c0_5, %c0_6], %6 {strides = array<i32>} : memref<2x32xf32, #tpu.memory_space<vmem>>, vector<2x32xf32>,
    %c0_i32_7 = arith.constant 0 : i32
    %8 = arith.cmpi eq, %arg2, %c0_i32_7 : i32
    %9 = arith.extui %8 : i1 to i32
    %c0_i32_8 = arith.constant 0 : i32
    %10 = arith.cmpi ne, %9, %c0_i32_8 : i32
    scf.if %10 {
      %c0_9 = arith.constant 0 : index
      %c0_10 = arith.constant 0 : index
      %11 = vector.load %arg5[%c0_9, %c0_10] : memref<2x32xf32, #tpu.memory_space<vmem>>, vector<2x32xf32>
      %cst_11 = arith.constant 6.250000e-02 : f32
      %12 = vector.broadcast %cst_11 : f32 to vector<2x32xf32>
      %13 = arith.mulf %11, %12 : vector<2x32xf32>
      %c0_12 = arith.constant 0 : index
      %c0_13 = arith.constant 0 : index
      %14 = vector.load %arg4[%c0_12, %c0_13] : memref<2x32xf32, #tpu.memory_space<vmem>>, vector<2x32xf32>
      tpu.vector_store %arg4[%c0_12, %c0_13], %13 {strides = array<i32>} : memref<2x32xf32, #tpu.memory_space<vmem>>, vector<2x32xf32>,
    } else {
    }
    return
  }
  func.func @transform_0(%arg0: i32, %arg1: i32, %arg2: i32) -> (i32, i32, i32) {
    %c0_i32 = arith.constant 0 : i32
    return %arg0, %arg2, %arg1 : i32, i32, i32
  }
  func.func @transform_1(%arg0: i32, %arg1: i32, %arg2: i32) -> (i32, i32) {
    %c0_i32 = arith.constant 0 : i32
    return %arg0, %arg1 : i32, i32
  }
}

</mosaic_0001>

<llo_original>
// kernel: tpu_custom_call.1
$region0: #{tpu_custom_call.1}
  #allocation0 [shape = 'u32[]', space=smem, size = 0x4, offset = 0x4, fixed_abs, tag = 'smem constant byte address 0x4 - core index']
  #allocation1 [shape = 'u32[144,128]{1,0:T(1,128)}', space=vmem, size = 0x12000, scoped, tag = 'internal scratch']
  #allocation2 [shape = 'f32[2,32]{1,0:T(2,128)}', space=vmem, size = 0x400, scoped, tag = 'scratch operand']
  %s0 = inlined_call_operand.hbm [shape: f32[2,16,32], index: 0, kind: input, shape index: {}]
  %s1 = inlined_call_operand.hbm [shape: f32[2,32], index: 1, kind: output, shape index: {}]
  %s2 = sld [smem:[#allocation0]]
  $region26: #{tpu_custom_call.1} parent=0
    _
  %s4 = ssub.s32 1, %s2
  %s5 = scalar_select 0, %s4, %s2
  $region1: #{tpu_custom_call.1} parent=0
    #allocation3 [shape = 'u8[16384]{0}', space=vmem, size = 0x4000, scoped, tag = 'input window, operand 0, single buffered']
    #allocation4 [shape = 's32[1]{0}', space=sflag, size = 0x4, scoped, tag = 'scoped memory for tpu_custom_call.1']
    #allocation5 [shape = 's32[1]{0}', space=sflag, size = 0x4, scoped, tag = 'scoped memory for tpu_custom_call.1']
    #allocation6 [shape = 'u8[1024]{0}', space=vmem, size = 0x400, scoped, tag = 'output window, operand 0, single buffered']
    %6 = vsyncpa [#allocation4], 0
    %7 = vsyncpa [#allocation5], 0
    // Predicated region
    $region2: #{tpu_custom_call.1} parent=1 // pred_check
      _
    $region3: #{tpu_custom_call.1} parent=1 // pred_check_branch
      %9 = sbr.rel (0) target = $region5
    $region4: #{tpu_custom_call.1} parent=1 // pred_region
      %s11 = ssub.s32 512, 512
      %12 = vsyncadd [#allocation4], %s11
      %s13 = sshll.u32 [#allocation3], 4
      %s14 = int_to_ptr.vmem [resolvable:$true] %s13
      %19 = dma.hbm_to_vmem [thread:$0]  %s0, 512, %s14, [#allocation4], 128, 128, 8
    $region5: #{tpu_custom_call.1} parent=1 // pred_fallthru
      _
    // Predicated region
    $region6: #{tpu_custom_call.1} parent=1 // pred_check
      _
    $region7: #{tpu_custom_call.1} parent=1 // pred_check_branch
      %21 = sbr.rel (0) target = $region9
    $region8: #{tpu_custom_call.1} parent=1 // pred_region
      %22 = dma.done [#allocation4], 512
    $region9: #{tpu_custom_call.1} parent=1 // pred_fallthru
      _
    %p23 = scmp.eq.s32.totalorder 0, 0
    // Predicated region
    $region10: #{tpu_custom_call.1} parent=1 // pred_check
      %p24 = pneg %p23
    $region11: #{tpu_custom_call.1} parent=1 // pred_check_branch
      %26 = sbr.rel (%p24) target = $region13
    $region12: #{tpu_custom_call.1} parent=1 // pred_region
      %vm27 = vcmask 254976
      %28 = vst.msk [vmem:[#allocation2] sm:$0x3] %vm27, 0.0
    $region13: #{tpu_custom_call.1} parent=1 // pred_fallthru
      _
    %v29 = vld [vmem:[#allocation2] sm:$0x3]
    %v30 = vld [vmem:[#allocation3] sm:$0xff]
    %v31 = vld [vmem:[#allocation3 + $0x8] sm:$0xff]
    %v32 = vld [vmem:[#allocation3 + $0x10] sm:$0xff]
    %v33 = vld [vmem:[#allocation3 + $0x18] sm:$0xff]
    %vm34 = vcmask 261120
    %v35 = vsel %vm34, %v30, 0.0
    %v36 = vsel %vm34, %v31, 0.0
    %v37 = vadd.f32 %v35, %v36
    %v38 = vrot.slane %v37, 4
    %v39 = vadd.f32 %v37, %v38
    %v40 = vrot.slane %v39, 2
    %v41 = vadd.f32 %v39, %v40
    %v42 = vrot.slane %v41, 1
    %v43 = vadd.f32 %v41, %v42
    %v44 = vsel %vm34, %v32, 0.0
    %v45 = vsel %vm34, %v33, 0.0
    %v46 = vadd.f32 %v44, %v45
    %v47 = vrot.slane %v46, 4
    %v48 = vadd.f32 %v46, %v47
    %v49 = vrot.slane %v48, 2
    %v50 = vadd.f32 %v48, %v49
    %v51 = vrot.slane %v50, 1
    %v52 = vadd.f32 %v50, %v51
    %vm55 = vcmask 1041409
    %v56 = vsel %vm55, %v52, %v43
    %v58 = vadd.f32 %v29, %v56
    %vm59 = vcmask 254976
    %60 = vst.msk [vmem:[#allocation2] sm:$0x3] %vm59, %v58
    // Predicated region
    $region14: #{tpu_custom_call.1} parent=1 // pred_check
      %p61 = pneg %p23
    $region15: #{tpu_custom_call.1} parent=1 // pred_check_branch
      %63 = sbr.rel (%p61) target = $region17
    $region16: #{tpu_custom_call.1} parent=1 // pred_region
      %v64 = vld [vmem:[#allocation2] sm:$0x3]
      %v65 = vmul.f32 %v64, 0.0625
      %66 = vst.msk [vmem:[#allocation6] sm:$0x3] %vm59, %v65
    $region17: #{tpu_custom_call.1} parent=1 // pred_fallthru
      _
    // Predicated region
    $region18: #{tpu_custom_call.1} parent=1 // pred_check
      _
    $region19: #{tpu_custom_call.1} parent=1 // pred_check_branch
      %68 = sbr.rel (0) target = $region21
    $region20: #{tpu_custom_call.1} parent=1 // pred_region
      %s70 = ssub.s32 32, 32
      %71 = vsyncadd [#allocation5], %s70
      %s73 = sshll.u32 [#allocation6], 4
      %s74 = int_to_ptr.vmem [resolvable:$true] %s73
      %76 = dma.vmem_to_hbm [thread:$0]  %s74, 32, %s1, [#allocation5]
    $region21: #{tpu_custom_call.1} parent=1 // pred_fallthru
      _
    // Predicated region
    $region22: #{tpu_custom_call.1} parent=1 // pred_check
      _
    $region23: #{tpu_custom_call.1} parent=1 // pred_check_branch
      %78 = sbr.rel (0) target = $region25
    $region24: #{tpu_custom_call.1} parent=1 // pred_region
      %79 = dma.done [#allocation5], 32
    $region25: #{tpu_custom_call.1} parent=1 // pred_fallthru
      _
    %80 = vsyncpa [#allocation4], 1
    %81 = vsyncpa [#allocation5], 1

</llo_original>
